<compile_context>
chip_gen: v5e
topology: v5e:2x2
jax: 0.10.0
libtpu: 0.0.40
codegen_flags: <defaults>
</compile_context>

<pallas_src>
import jax
import jax.numpy as jnp
from jax.experimental import pallas as pl
from jax.experimental.pallas import tpu as pltpu


def _lm_loss_kernel(logits_ref, yw_ref, loss_ref, wsum_ref):
    # logits_ref: (1, tm, V) in the native dtype; yw_ref: (1, tm, 2) f32.
    x = logits_ref[0]                              # (tm, V) bf16/f32
    yw = yw_ref[0]                                 # (tm, 2) f32
    y = yw[:, 0:1].astype(jnp.int32)               # (tm, 1) label (0 for masked rows)
    w = yw[:, 1:2]                                 # (tm, 1) f32, 0 for ignored/padded/OOB rows

    # Row max and shift stay in the input dtype; only (tm,1) f32 results are kept.
    m = jnp.max(x, axis=-1, keepdims=True)         # (tm, 1)
    xm = x - m                                     # (tm, V), native dtype

    vocab_ids = jax.lax.broadcasted_iota(jnp.int32, (1, x.shape[-1]), 1)  # (1, V)
    # Target logit (already max-shifted), fused with the same xm pass.
    tgt_m = jnp.sum(
        jnp.where(vocab_ids == y, xm, jnp.zeros_like(xm)).astype(jnp.float32),
        axis=-1, keepdims=True)                    # (tm, 1) f32
    # exp upcast fused into the reduction (no stored f32 tile).
    sum_p = jnp.sum(jnp.exp(xm.astype(jnp.float32)), axis=-1, keepdims=True)  # (tm, 1)

    # loss_row = logsumexp(x) - x[y] = log(sum exp(x - m)) - (x[y] - m)
    # Select (not multiply) guards against NaN/Inf from garbage OOB rows (w == 0).
    nll = jnp.where(w != 0.0, (jnp.log(sum_p) - tgt_m) * w, 0.0)  # (tm, 1)

    loss_ref[...] = jnp.sum(nll).reshape(1, 1, 1)
    wsum_ref[...] = jnp.sum(w).reshape(1, 1, 1)


def _vmem_capacity_bytes():
    try:
        info = pltpu.get_tpu_info()
        cap = getattr(info, "vmem_capacity_bytes", None)
        if cap:
            return int(cap)
    except Exception:
        pass
    return 64 * 1024 * 1024  # conservative: v7x per-TC VMEM


def lm_loss_pallas(logits, labels, class_weights, *, ignore_index=-100, tm=None):
    """Pallas implementation of LMLoss.forward.

    logits: (B, T, V) float (bf16 or f32; streamed from HBM in native dtype)
    labels: (B, T) int
    class_weights: (V,) float (all ones when no critical tokens)
    tm: optional row-tile override (auto-derived from VMEM budget if None)
    """
    B, T, V = logits.shape
    rows = T - 1
    assert rows > 0, "need at least 2 tokens for shifted LM loss"
    assert V < (1 << 24), "labels are carried exactly in an f32 lane"

    itemsize = jnp.dtype(logits.dtype).itemsize
    row_align = max(8, 32 // itemsize)  # 8 rows f32, 16 bf16, 32 int8/fp8

    # ---- Vocab-aware tile size from a per-generation VMEM budget ----
    vmem_cap = _vmem_capacity_bytes()
    vmem_budget = max(24 * 1024 * 1024,
                      min(int(0.75 * vmem_cap), vmem_cap - 16 * 1024 * 1024))
    # Per tile row: double-buffered native logits + (x - m) strip + one f32 strip.
    per_row = V * (3 * itemsize + 4) + 64
    tm_budget = max(row_align, ((vmem_budget // per_row) // row_align) * row_align)

    cand = tm_budget if tm is None else max(row_align, (int(tm) // row_align) * row_align)
    if rows <= row_align:
        tm_eff, n_tiles = T, 1                # single block spanning the full T dim
    else:
        tm_max = (rows // row_align) * row_align   # largest aligned tile <= rows (< T)
        tm_eff = min(cand, tm_max)
        n_tiles = pl.cdiv(rows, tm_eff)
    t_pad = tm_eff * n_tiles

    # ---- Shifted labels + per-row class weights, packed (tiny; plain JAX) ----
    y = labels[:, 1:].astype(jnp.int32)                         # (B, rows)
    pad = t_pad - rows
    if pad:
        y = jnp.pad(y, ((0, 0), (0, pad)), constant_values=ignore_index)
    valid = y != ignore_index
    y_safe = jnp.where(valid, y, 0)
    w_row = jnp.where(valid, class_weights.astype(jnp.float32)[y_safe], 0.0)
    yw = jnp.stack([y_safe.astype(jnp.float32), w_row], axis=-1)  # (B, t_pad, 2)

    needed = per_row * tm_eff + (4 << 20)
    vmem_limit = int(max(16 << 20,
                         min(vmem_cap - (8 << 20), max(vmem_budget, needed))))

    cost = pl.CostEstimate(
        flops=int(5 * B * rows * V),
        transcendentals=int(B * rows * V),
        bytes_accessed=int(B * T * V * itemsize + B * t_pad * 8 + 8 * B * n_tiles),
    )

    out_struct = jax.ShapeDtypeStruct((B * n_tiles, 1, 1), jnp.float32)
    loss_part, wsum_part = pl.pallas_call(
        _lm_loss_kernel,
        out_shape=(out_struct, out_struct),
        grid_spec=pltpu.PrefetchScalarGridSpec(
            num_scalar_prefetch=0,
            grid=(B, n_tiles),
            in_specs=[
                pl.BlockSpec((1, tm_eff, V), lambda b, i: (b, i, 0)),  # shift via index_map
                pl.BlockSpec((1, tm_eff, 2), lambda b, i: (b, i, 0)),  # packed labels+weights
            ],
            out_specs=(
                pl.BlockSpec((1, 1, 1), lambda b, i: (b * n_tiles + i, 0, 0)),
                pl.BlockSpec((1, 1, 1), lambda b, i: (b * n_tiles + i, 0, 0)),
            ),
        ),
        compiler_params=pltpu.CompilerParams(
            dimension_semantics=("parallel", "parallel"),
            vmem_limit_bytes=vmem_limit,
        ),
        cost_estimate=cost,
    )(logits, yw)

    # Final tree-sum + divide in plain JAX (megacore-safe reduction).
    # NOTE: if every label is ignore_index this is 0/0 = NaN, same as torch.
    return jnp.sum(loss_part) / jnp.sum(wsum_part)


def lm_loss_ref(logits, labels, class_weights, *, ignore_index=-100):
    """Pure-JAX reference matching torch.nn.functional.cross_entropy semantics."""
    B, T, V = logits.shape
    x = logits[:, :-1, :].reshape(-1, V).astype(jnp.float32)
    y = labels[:, 1:].reshape(-1).astype(jnp.int32)
    lse = jax.nn.logsumexp(x, axis=-1)
    y_safe = jnp.where(y == ignore_index, 0, y)
    tgt = jnp.take_along_axis(x, y_safe[:, None], axis=-1)[:, 0]
    valid = (y != ignore_index).astype(jnp.float32)
    w = class_weights.astype(jnp.float32)[y_safe] * valid
    return jnp.sum((lse - tgt) * w) / jnp.sum(w)


if __name__ == "__main__":
    key = jax.random.PRNGKey(0)
    ignore_index = -100
    critical_tokens = [3, 7, 42]
    critical_alpha = 2.0

    # --- Case 1: small f32 shape, single tile covering the whole T dim ---
    B, T, V = 2, 8, 128
    k1, k2 = jax.random.split(key)
    logits = jax.random.normal(k1, (B, T, V), dtype=jnp.float32)
    labels = jax.random.randint(k2, (B, T), 0, V, dtype=jnp.int32)
    labels = labels.at[0, 3].set(ignore_index)
    labels = labels.at[1, 5].set(ignore_index)

    class_weights = jnp.ones((V,), dtype=jnp.float32)
    class_weights = class_weights.at[jnp.array(critical_tokens)].set(critical_alpha)

    loss = lm_loss_pallas(logits, labels, class_weights, ignore_index=ignore_index)
    loss = jax.block_until_ready(loss)
    ref = lm_loss_ref(logits, labels, class_weights, ignore_index=ignore_index)
    assert jnp.allclose(loss, ref, rtol=1e-5, atol=1e-5), (loss, ref)

    # --- Case 2: bf16, multi-tile grid with a partially OOB last logits tile ---
    B2, T2, V2 = 2, 20, 256
    k3, k4 = jax.random.split(k1)
    logits2 = jax.random.normal(k3, (B2, T2, V2), dtype=jnp.bfloat16)
    labels2 = jax.random.randint(k4, (B2, T2), 0, V2, dtype=jnp.int32)
    labels2 = labels2.at[1, 2].set(ignore_index)
    cw2 = jnp.ones((V2,), dtype=jnp.float32)
    cw2 = cw2.at[jnp.array(critical_tokens)].set(critical_alpha)

    loss2 = lm_loss_pallas(logits2, labels2, cw2, ignore_index=ignore_index, tm=16)
    loss2 = jax.block_until_ready(loss2)
    ref2 = lm_loss_ref(logits2, labels2, cw2, ignore_index=ignore_index)
    assert jnp.allclose(loss2, ref2, rtol=2e-2, atol=2e-2), (loss2, ref2)  # bf16 logits

    # --- Case 3: bf16, B=1, auto (VMEM-budget-derived) tile size ---
    B3, T3, V3 = 1, 33, 512
    k5, k6 = jax.random.split(k3)
    logits3 = jax.random.normal(k5, (B3, T3, V3), dtype=jnp.bfloat16)
    labels3 = jax.random.randint(k6, (B3, T3), 0, V3, dtype=jnp.int32)
    labels3 = labels3.at[0, 7].set(ignore_index)
    cw3 = jnp.ones((V3,), dtype=jnp.float32)
    cw3 = cw3.at[jnp.array(critical_tokens)].set(critical_alpha)

    loss3 = lm_loss_pallas(logits3, labels3, cw3, ignore_index=ignore_index)
    loss3 = jax.block_until_ready(loss3)
    ref3 = lm_loss_ref(logits3, labels3, cw3, ignore_index=ignore_index)
    assert jnp.allclose(loss3, ref3, rtol=2e-2, atol=2e-2), (loss3, ref3)

    print("KERNEL_OK")
</pallas_src>

<mosaic_0001>
module attributes {stable_mosaic.version = 11 : i64} {
  func.func @_lm_loss_kernel(%arg0: i32, %arg1: i32, %arg2: memref<1x8x128xf32, #tpu.memory_space<vmem>>, %arg3: memref<1x8x2xf32, #tpu.memory_space<vmem>>, %arg4: memref<1x1x1xf32, #tpu.memory_space<vmem>>, %arg5: memref<1x1x1xf32, #tpu.memory_space<vmem>>) attributes {dimension_semantics = [#tpu.dimension_semantics<parallel>, #tpu.dimension_semantics<parallel>], iteration_bounds = array<i64: 2, 1>, scalar_prefetch = 0 : i64, scratch_operands = 0 : i64, tpu.core_type = #tpu.core_type<tc>, window_params = [{transform_indices = @transform_0, window_bounds = array<i64: 1, 8, 128>}, {transform_indices = @transform_1, window_bounds = array<i64: 1, 8, 2>}, {transform_indices = @transform_2, window_bounds = array<i64: 1, 1, 1>}, {transform_indices = @transform_3, window_bounds = array<i64: 1, 1, 1>}]} {
    %c0 = arith.constant 0 : index
    %c0_0 = arith.constant 0 : index
    %c0_1 = arith.constant 0 : index
    %0 = vector.load %arg2[%c0, %c0_0, %c0_1] : memref<1x8x128xf32, #tpu.memory_space<vmem>>, vector<1x8x128xf32>
    %1 = vector.shape_cast %0 : vector<1x8x128xf32> to vector<8x128xf32>
    %c0_2 = arith.constant 0 : index
    %c0_3 = arith.constant 0 : index
    %c0_4 = arith.constant 0 : index
    %2 = vector.load %arg3[%c0_2, %c0_3, %c0_4] : memref<1x8x2xf32, #tpu.memory_space<vmem>>, vector<1x8x2xf32>
    %3 = vector.shape_cast %2 : vector<1x8x2xf32> to vector<8x2xf32>
    %4 = vector.extract_strided_slice %3 {offsets = [0, 0], sizes = [8, 1], strides = [1, 1]} : vector<8x2xf32> to vector<8x1xf32>
    %5 = arith.fptosi %4 : vector<8x1xf32> to vector<8x1xi32>
    %6 = vector.extract_strided_slice %3 {offsets = [0, 1], sizes = [8, 1], strides = [1, 1]} : vector<8x2xf32> to vector<8x1xf32>
    %cst = arith.constant dense<0xFF800000> : vector<8xf32>
    %7 = vector.multi_reduction <maximumf>, %1, %cst [1] : vector<8x128xf32> to vector<8xf32>
    %8 = vector.shape_cast %7 : vector<8xf32> to vector<8x1xf32>
    %9 = vector.broadcast %8 : vector<8x1xf32> to vector<8x128xf32>
    %10 = arith.subf %1, %9 : vector<8x128xf32>
    %11 = tpu.iota {dimensions = array<i32: 1>} : vector<1x128xi32>
    %12 = vector.broadcast %11 : vector<1x128xi32> to vector<8x128xi32>
    %13 = vector.broadcast %5 : vector<8x1xi32> to vector<8x128xi32>
    %14 = arith.cmpi eq, %12, %13 : vector<8x128xi32>
    %cst_5 = arith.constant 0.000000e+00 : f32
    %15 = vector.broadcast %cst_5 : f32 to vector<8x128xf32>
    %16 = arith.select %14, %10, %15 : vector<8x128xi1>, vector<8x128xf32>
    %cst_6 = arith.constant dense<0.000000e+00> : vector<8xf32>
    %17 = vector.multi_reduction <add>, %16, %cst_6 [1] : vector<8x128xf32> to vector<8xf32>
    %18 = vector.shape_cast %17 : vector<8xf32> to vector<8x1xf32>
    %19 = math.exp %10 : vector<8x128xf32>
    %cst_7 = arith.constant dense<0.000000e+00> : vector<8xf32>
    %20 = vector.multi_reduction <add>, %19, %cst_7 [1] : vector<8x128xf32> to vector<8xf32>
    %21 = vector.shape_cast %20 : vector<8xf32> to vector<8x1xf32>
    %cst_8 = arith.constant 0.000000e+00 : f32
    %22 = vector.broadcast %cst_8 : f32 to vector<8x1xf32>
    %23 = arith.cmpf one, %6, %22 : vector<8x1xf32>
    %24 = math.log %21 : vector<8x1xf32>
    %25 = arith.subf %24, %18 : vector<8x1xf32>
    %26 = arith.mulf %25, %6 : vector<8x1xf32>
    %cst_9 = arith.constant 0.000000e+00 : f32
    %27 = vector.broadcast %cst_9 : f32 to vector<8x1xf32>
    %28 = arith.select %23, %26, %27 : vector<8x1xi1>, vector<8x1xf32>
    %29 = vector.shape_cast %28 : vector<8x1xf32> to vector<1x8x1xf32>
    %cst_10 = arith.constant dense<0.000000e+00> : vector<1xf32>
    %30 = vector.multi_reduction <add>, %29, %cst_10 [1, 2] : vector<1x8x1xf32> to vector<1xf32>
    %31 = vector.shape_cast %30 : vector<1xf32> to vector<1x1x1xf32>
    %32 = vector.extract %31[0, 0, 0] : f32 from vector<1x1x1xf32>
    %33 = vector.broadcast %32 : f32 to vector<1x1x1xf32>
    %c0_11 = arith.constant 0 : index
    %c0_12 = arith.constant 0 : index
    %c0_13 = arith.constant 0 : index
    %34 = vector.load %arg4[%c0_11, %c0_12, %c0_13] : memref<1x1x1xf32, #tpu.memory_space<vmem>>, vector<1x1x1xf32>
    tpu.vector_store %arg4[%c0_11, %c0_12, %c0_13], %33 {strides = array<i32>} : memref<1x1x1xf32, #tpu.memory_space<vmem>>, vector<1x1x1xf32>,
    %35 = vector.shape_cast %6 : vector<8x1xf32> to vector<1x8x1xf32>
    %cst_14 = arith.constant dense<0.000000e+00> : vector<1xf32>
    %36 = vector.multi_reduction <add>, %35, %cst_14 [1, 2] : vector<1x8x1xf32> to vector<1xf32>
    %37 = vector.shape_cast %36 : vector<1xf32> to vector<1x1x1xf32>
    %38 = vector.extract %37[0, 0, 0] : f32 from vector<1x1x1xf32>
    %39 = vector.broadcast %38 : f32 to vector<1x1x1xf32>
    %c0_15 = arith.constant 0 : index
    %c0_16 = arith.constant 0 : index
    %c0_17 = arith.constant 0 : index
    %40 = vector.load %arg5[%c0_15, %c0_16, %c0_17] : memref<1x1x1xf32, #tpu.memory_space<vmem>>, vector<1x1x1xf32>
    tpu.vector_store %arg5[%c0_15, %c0_16, %c0_17], %39 {strides = array<i32>} : memref<1x1x1xf32, #tpu.memory_space<vmem>>, vector<1x1x1xf32>,
    return
  }
  func.func @transform_0(%arg0: i32, %arg1: i32) -> (i32, i32, i32) {
    %c0_i32 = arith.constant 0 : i32
    %c0_i32_0 = arith.constant 0 : i32
    return %arg0, %arg1, %c0_i32 : i32, i32, i32
  }
  func.func @transform_1(%arg0: i32, %arg1: i32) -> (i32, i32, i32) {
    %c0_i32 = arith.constant 0 : i32
    %c0_i32_0 = arith.constant 0 : i32
    return %arg0, %arg1, %c0_i32 : i32, i32, i32
  }
  func.func @transform_2(%arg0: i32, %arg1: i32) -> (i32, i32, i32) {
    %c1_i32 = arith.constant 1 : i32
    %0 = arith.muli %arg0, %c1_i32 : i32
    %1 = arith.addi %0, %arg1 : i32
    %c0_i32 = arith.constant 0 : i32
    %c0_i32_0 = arith.constant 0 : i32
    %c0_i32_1 = arith.constant 0 : i32
    return %1, %c0_i32, %c0_i32_0 : i32, i32, i32
  }
  func.func @transform_3(%arg0: i32, %arg1: i32) -> (i32, i32, i32) {
    %c1_i32 = arith.constant 1 : i32
    %0 = arith.muli %arg0, %c1_i32 : i32
    %1 = arith.addi %0, %arg1 : i32
    %c0_i32 = arith.constant 0 : i32
    %c0_i32_0 = arith.constant 0 : i32
    %c0_i32_1 = arith.constant 0 : i32
    return %1, %c0_i32, %c0_i32_0 : i32, i32, i32
  }
}

</mosaic_0001>

<llo_original>
// kernel: tpu_custom_call.1
$region0: #{tpu_custom_call.1}
  #allocation0 [shape = 'u32[]', space=smem, size = 0x4, offset = 0x4, fixed_abs, tag = 'smem constant byte address 0x4 - core index']
  #allocation1 [shape = 'u32[72,128]{1,0:T(1,128)}', space=vmem, size = 0x9000, scoped, tag = 'internal scratch']
  %s0 = inlined_call_operand.vmem [shape: f32[2,8,128], index: 0, kind: input, shape index: {}]
  %s1 = inlined_call_operand.vmem [shape: f32[2,8,2], index: 1, kind: input, shape index: {}]
  %s2 = inlined_call_operand.vmem [shape: f32[2,1,1], index: 2, kind: output, shape index: {0}]
  %s3 = inlined_call_operand.vmem [shape: f32[2,1,1], index: 3, kind: output, shape index: {1}]
  %4 = xla_tuple %s2, %s3
  %s5 = sld [smem:[#allocation0]]
  $region49: #{tpu_custom_call.1} parent=0
    _
  %s7 = ssub.s32 1, %s5
  %s8 = scalar_select 0, %s7, %s5
  loop: start=0, step=1, limit=4
  $region2: #{tpu_custom_call.1} parent=0 // loop_pre_header
    _
  $region3: #{tpu_custom_call.1} parent=0 // loop_header
    %s10 = sphi 0, %s14
    %p11 = scmp.ge.s32.totalorder %s10, 4
    %s17 = sphi 0, %s29
    %s18 = sphi 0, %s25
    %s19 = sphi 0, %s17
    %s20 = sphi 0, %s18
    %s21 = sphi 0, %s19
    %s22 = sphi 0, %s20
    %s34 = sphi 0, %s36
    %s37 = sphi 0, %s34
    %s38 = sphi 0, %s37
    %s54 = sphi 0, %s38
    %s62 = sphi 0, %s64
    %s65 = sphi 0, %s62
    %s66 = sphi 0, %s65
    %s82 = sphi 0, %s66
    %s90 = sphi 0, %s92
    %s93 = sphi 0, %s90
    %s94 = sphi 0, %s93
    %s110 = sphi 0, %s94
    %s118 = sphi 0, %s120
    %s121 = sphi 0, %s118
    %s122 = sphi 0, %s121
    %s138 = sphi 0, %s122
  $region4: #{tpu_custom_call.1} parent=0 // loop_header_branch
    %13 = sbr.rel (%p11) target = $region8
  $region5: #{tpu_custom_call.1} parent=0 // loop_body
    %s15 = ssub.s32 %s10, 1
    %s16 = ssub.s32 %s10, 2
    %s23 = sadd.s32 1, %s18
    %p24 = scmp.ge.s32.totalorder %s23, 1
    %s25 = scalar_select %p24, 0, %s23
    %s26 = sadd.s32 1, %s17
    %s27 = scalar_select %p24, %s26, %s17
    %p28 = scmp.ge.s32.totalorder %s27, 2
    %s29 = scalar_select %p28, 0, %s27
    %s30 = ssub.s32 %s17, %s29
    %s31 = ssub.s32 %s18, %s25
    %s32 = sor.u32 %s30, %s31
    %p33 = scmp.eq.s32.totalorder %s32, 0
    %s35 = sadd.s32 %s34, 1
    %s36 = scalar_select %p33, %s34, %s35
    %p39 = pneg %p33
    %p40 = scmp.eq.s32.totalorder %s10, 1
    %p41 = por %p39, %p40
    %p42 = scmp.ne.s32.totalorder %s34, %s37
    %p43 = scmp.eq.s32.totalorder %s10, 0
    %p44 = por %p42, %p43
    %p45 = scmp.ne.s32.totalorder %s34, %s37
    %p46 = scmp.eq.s32.totalorder %s15, 1
    %p47 = por %p45, %p46
    %p48 = scmp.ne.s32.totalorder %s37, %s38
    %p49 = scmp.eq.s32.totalorder %s15, 0
    %p50 = por %p48, %p49
    %p51 = scmp.ne.s32.totalorder %s37, %s38
    %p52 = scmp.eq.s32.totalorder %s16, 1
    %p53 = por %p51, %p52
    %p55 = scmp.ne.s32.totalorder %s38, %s54
    %p56 = scmp.eq.s32.totalorder %s16, 0
    %p57 = por %p55, %p56
    %s58 = ssub.s32 %s17, %s29
    %s59 = ssub.s32 %s18, %s25
    %s60 = sor.u32 %s58, %s59
    %p61 = scmp.eq.s32.totalorder %s60, 0
    %s63 = sadd.s32 %s62, 1
    %s64 = scalar_select %p61, %s62, %s63
    %p67 = pneg %p61
    %p68 = scmp.eq.s32.totalorder %s10, 1
    %p69 = por %p67, %p68
    %p70 = scmp.ne.s32.totalorder %s62, %s65
    %p71 = scmp.eq.s32.totalorder %s10, 0
    %p72 = por %p70, %p71
    %p73 = scmp.ne.s32.totalorder %s62, %s65
    %p74 = scmp.eq.s32.totalorder %s15, 1
    %p75 = por %p73, %p74
    %p76 = scmp.ne.s32.totalorder %s65, %s66
    %p77 = scmp.eq.s32.totalorder %s15, 0
    %p78 = por %p76, %p77
    %p79 = scmp.ne.s32.totalorder %s65, %s66
    %p80 = scmp.eq.s32.totalorder %s16, 1
    %p81 = por %p79, %p80
    %p83 = scmp.ne.s32.totalorder %s66, %s82
    %p84 = scmp.eq.s32.totalorder %s16, 0
    %p85 = por %p83, %p84
    %s86 = sadd.s32 %s17, %s18
    %s87 = sadd.s32 %s29, %s25
    %s88 = ssub.s32 %s86, %s87
    %p89 = scmp.eq.s32.totalorder %s88, 0
    %s91 = sadd.s32 %s90, 1
    %s92 = scalar_select %p89, %s90, %s91
    %p95 = pneg %p89
    %p96 = scmp.eq.s32.totalorder %s10, 1
    %p97 = por %p95, %p96
    %p98 = scmp.ne.s32.totalorder %s90, %s93
    %p99 = scmp.eq.s32.totalorder %s10, 0
    %p100 = por %p98, %p99
    %p101 = scmp.ne.s32.totalorder %s90, %s93
    %p102 = scmp.eq.s32.totalorder %s15, 1
    %p103 = por %p101, %p102
    %p104 = scmp.ne.s32.totalorder %s93, %s94
    %p105 = scmp.eq.s32.totalorder %s15, 0
    %p106 = por %p104, %p105
    %p107 = scmp.ne.s32.totalorder %s93, %s94
    %p108 = scmp.eq.s32.totalorder %s16, 1
    %p109 = por %p107, %p108
    %p111 = scmp.ne.s32.totalorder %s94, %s110
    %p112 = scmp.eq.s32.totalorder %s16, 0
    %p113 = por %p111, %p112
    %s114 = sadd.s32 %s17, %s18
    %s115 = sadd.s32 %s29, %s25
    %s116 = ssub.s32 %s114, %s115
    %p117 = scmp.eq.s32.totalorder %s116, 0
    %s119 = sadd.s32 %s118, 1
    %s120 = scalar_select %p117, %s118, %s119
    %p123 = pneg %p117
    %p124 = scmp.eq.s32.totalorder %s10, 1
    %p125 = por %p123, %p124
    %p126 = scmp.ne.s32.totalorder %s118, %s121
    %p127 = scmp.eq.s32.totalorder %s10, 0
    %p128 = por %p126, %p127
    %p129 = scmp.ne.s32.totalorder %s118, %s121
    %p130 = scmp.eq.s32.totalorder %s15, 1
    %p131 = por %p129, %p130
    %p132 = scmp.ne.s32.totalorder %s121, %s122
    %p133 = scmp.eq.s32.totalorder %s15, 0
    %p134 = por %p132, %p133
    %p135 = scmp.ne.s32.totalorder %s121, %s122
    %p136 = scmp.eq.s32.totalorder %s16, 1
    %p137 = por %p135, %p136
    %p139 = scmp.ne.s32.totalorder %s122, %s138
    %p140 = scmp.eq.s32.totalorder %s16, 0
    %p141 = por %p139, %p140
    %p142 = scmp.le.s32.totalorder 1, %s10
    %p143 = scmp.lt.s32.totalorder %s10, 3
    %p144 = pnand %p142, %p143
    %p145 = pneg %p144
    // Predicated region
    $region9: #{tpu_custom_call.1} parent=5 // pred_check
      _
    $region10: #{tpu_custom_call.1} parent=5 // pred_check_branch
      %147 = sbr.rel (%p144) target = $region12
    $region11: #{tpu_custom_call.1} parent=5 // pred_region
      %s148 = ssub.s32 %s10, 1
    $region12: #{tpu_custom_call.1} parent=5 // pred_fallthru
      _
    %p149 = scmp.lt.s32.totalorder %s10, 2
    // Predicated region
    $region13: #{tpu_custom_call.1} parent=5 // pred_check
      %p150 = pneg %p149
    $region14: #{tpu_custom_call.1} parent=5 // pred_check_branch
      %152 = sbr.rel (%p150) target = $region16
    $region15: #{tpu_custom_call.1} parent=5 // pred_region
      // Predicated region
      $region17: #{tpu_custom_call.1} parent=15 // pred_check
        %p153 = pneg %p44
      $region18: #{tpu_custom_call.1} parent=15 // pred_check_branch
        %155 = sbr.rel (%p153) target = $region20
      $region19: #{tpu_custom_call.1} parent=15 // pred_region
        %p156 = scmp.lt.s32.totalorder %s17, 1
        %s157 = scalar_select %p156, %s17, 1
        %p158 = scmp.lt.s32.totalorder %s18, 0
        %s159 = scalar_select %p158, %s18, 0
        %s160 = sadd.s32 %s159, %s157
        %s161 = smul.addr %s160, 8
        %s162 = scalar_lea.vmem %s0, %s161
      $region20: #{tpu_custom_call.1} parent=15 // pred_fallthru
        _
      // Predicated region
      $region21: #{tpu_custom_call.1} parent=15 // pred_check
        %p163 = pneg %p72
      $region22: #{tpu_custom_call.1} parent=15 // pred_check_branch
        %165 = sbr.rel (%p163) target = $region24
      $region23: #{tpu_custom_call.1} parent=15 // pred_region
        %p166 = scmp.lt.s32.totalorder %s17, 1
        %s167 = scalar_select %p166, %s17, 1
        %p168 = scmp.lt.s32.totalorder %s18, 0
        %s169 = scalar_select %p168, %s18, 0
        %s170 = sadd.s32 %s169, %s167
        %s171 = smul.addr %s170, 8
        %s172 = scalar_lea.vmem %s1, %s171
      $region24: #{tpu_custom_call.1} parent=15 // pred_fallthru
        _
    $region16: #{tpu_custom_call.1} parent=5 // pred_fallthru
      _
    %p173 = scmp.le.s32.totalorder 1, %s10
    %p174 = scmp.lt.s32.totalorder %s10, 3
    %p175 = pnand %p173, %p174
    %p176 = pneg %p175
    // Predicated region
    $region25: #{tpu_custom_call.1} parent=5 // pred_check
      _
    $region26: #{tpu_custom_call.1} parent=5 // pred_check_branch
      %178 = sbr.rel (%p175) target = $region28
    $region27: #{tpu_custom_call.1} parent=5 // pred_region
      %s179 = ssub.s32 %s10, 1
      %p180 = scmp.lt.s32.totalorder %s19, 1
      %s181 = scalar_select %p180, %s19, 1
      %p182 = scmp.lt.s32.totalorder %s20, 0
      %s183 = scalar_select %p182, %s20, 0
      %s184 = sadd.s32 %s183, %s181
      %s185 = smul.addr %s184, 8
      %s186 = scalar_lea.vmem %s0, %s185
      %p187 = pneg %p50
      %p188 = pneg %p47
      %p189 = scmp.lt.s32.totalorder %s19, 1
      %s190 = scalar_select %p189, %s19, 1
      %p191 = scmp.lt.s32.totalorder %s20, 0
      %s192 = scalar_select %p191, %s20, 0
      %s193 = sadd.s32 %s192, %s190
      %s194 = smul.addr %s193, 8
      %s195 = scalar_lea.vmem %s1, %s194
      %p196 = pneg %p78
      %p197 = pneg %p75
      %p198 = pneg %p106
      %p199 = pneg %p103
      %s200 = sadd.s32 %s19, %s20
      %p201 = scmp.lt.s32.totalorder %s200, 1
      %s202 = scalar_select %p201, %s200, 1
      %s203 = scalar_lea.vmem %s2, %s202
      %p204 = pneg %p134
      %p205 = pneg %p131
      %s206 = sadd.s32 %s19, %s20
      %p207 = scmp.lt.s32.totalorder %s206, 1
      %s208 = scalar_select %p207, %s206, 1
      %s209 = scalar_lea.vmem %s3, %s208
      %p210 = scmp.lt.s32.totalorder %s19, 1
      %s211 = scalar_select %p210, %s19, 1
      %p212 = scmp.lt.s32.totalorder %s20, 0
      %s213 = scalar_select %p212, %s20, 0
      %s214 = sadd.s32 %s213, %s211
      %s215 = smul.addr %s214, 8
      %s216 = scalar_lea.vmem %s0, %s215
      %p217 = scmp.lt.s32.totalorder %s19, 1
      %s218 = scalar_select %p217, %s19, 1
      %p219 = scmp.lt.s32.totalorder %s20, 0
      %s220 = scalar_select %p219, %s20, 0
      %s221 = sadd.s32 %s220, %s218
      %s222 = smul.addr %s221, 8
      %s223 = scalar_lea.vmem %s1, %s222
      %s224 = sadd.s32 %s19, %s20
      %p225 = scmp.lt.s32.totalorder %s224, 1
      %s226 = scalar_select %p225, %s224, 1
      %s227 = scalar_lea.vmem %s2, %s226
      %s228 = sadd.s32 %s19, %s20
      %s229 = sadd.s32 %s19, %s20
      %p230 = scmp.lt.s32.totalorder %s229, 1
      %s231 = scalar_select %p230, %s229, 1
      %s232 = scalar_lea.vmem %s3, %s231
      %s233 = sadd.s32 %s19, %s20
      %v234 = vld [vmem:[%s216] sm:$0xff]
      %v235 = vld [vmem:[%s223] sm:$0xff]
      %v236 = vcvt.f32.s32.to.zero.pseudo %v235
      %237 = vmax.xlane.f32.xlu0 %v234
      %v238 = vpop.xlane.xlu0 %237
      %v239 = vsub.f32 %v234, %v238
      %v240 = vlaneseq
      %v241 = vand.u32 %v240, 127
      %242 = vset.pattern.permute.xlu0 0
      %243 = vperm.xlu0 %242, %v236
      %v244 = vpop.permute.xlu0 %243
      %vm245 = vcmp.eq.s32.totalorder %v241, %v244
      %v246 = vsel %vm245, %v239, 0.0
      %247 = vadd.xlane.f32.xlu0 %v246
      %v248 = vpop.xlane.xlu0 %247
      %v249 = vmul.f32 %v239, 1.442695
      %v250 = vpow.pop %v249
      %251 = vadd.xlane.f32.xlu0 %v250
      %v252 = vpop.xlane.xlu0 %251
      %vm253 = vcmp.ne.f32.partialorder %v235, 0.0
      %v254 = vlog2.pop %v252
      %v255 = vmul.f32 %v254, 0.6931472
      %v256 = vsub.f32 %v255, %v248
      %v257 = vmul.f32 %v256, %v235
      %v258 = vsel %vm253, %v257, 0.0
      %260 = vrot.lane.b32.xlu0 %v258, 127
      %v261 = vpop.permute.xlu0 %260
      %vm263 = vcmask 7168
      %v264 = vsel %vm263, %v261, 0.0
      %265 = vadd.xlane.f32.xlu0 %v264
      %v266 = vpop.xlane.xlu0 %265
      %v267 = vrot.slane %v266, 4
      %v268 = vadd.f32 %v266, %v267
      %v269 = vrot.slane %v268, 2
      %v270 = vadd.f32 %v268, %v269
      %v271 = vrot.slane %v270, 1
      %v272 = vadd.f32 %v270, %v271
      %s273 = vtos %v272
      %v274 = vstv %s273
      %vm275 = vcmask 0
      %276 = vst.msk [vmem:[%s227] sm:$0x1] %vm275, %v274
      %278 = vrot.lane.b32.xlu0 %v235, 127
      %v279 = vpop.permute.xlu0 %278
      %v281 = vsel %vm263, %v279, 0.0
      %282 = vadd.xlane.f32.xlu0 %v281
      %v283 = vpop.xlane.xlu0 %282
      %v284 = vrot.slane %v283, 4
      %v285 = vadd.f32 %v283, %v284
      %v286 = vrot.slane %v285, 2
      %v287 = vadd.f32 %v285, %v286
      %v288 = vrot.slane %v287, 1
      %v289 = vadd.f32 %v287, %v288
      %s290 = vtos %v289
      %v291 = vstv %s290
      %292 = vst.msk [vmem:[%s232] sm:$0x1] %vm275, %v291
      %s293 = sadd.s32 %s19, %s20
      %p294 = scmp.lt.s32.totalorder %s293, 1
      %s295 = scalar_select %p294, %s293, 1
      %s296 = scalar_lea.vmem %s2, %s295
      %s297 = sadd.s32 %s19, %s20
      %p298 = scmp.lt.s32.totalorder %s297, 1
      %s299 = scalar_select %p298, %s297, 1
      %s300 = scalar_lea.vmem %s3, %s299
      // Predicated region
      $region29: #{tpu_custom_call.1} parent=27 // pred_check
        %p301 = pneg %p103
      $region30: #{tpu_custom_call.1} parent=27 // pred_check_branch
        %303 = sbr.rel (%p301) target = $region32
      $region31: #{tpu_custom_call.1} parent=27 // pred_region
        %s304 = sadd.s32 %s19, %s20
      $region32: #{tpu_custom_call.1} parent=27 // pred_fallthru
        _
      // Predicated region
      $region33: #{tpu_custom_call.1} parent=27 // pred_check
        %p305 = pneg %p131
      $region34: #{tpu_custom_call.1} parent=27 // pred_check_branch
        %307 = sbr.rel (%p305) target = $region36
      $region35: #{tpu_custom_call.1} parent=27 // pred_region
        %s308 = sadd.s32 %s19, %s20
      $region36: #{tpu_custom_call.1} parent=27 // pred_fallthru
        _
    $region28: #{tpu_custom_call.1} parent=5 // pred_fallthru
      _
    %p309 = scmp.le.s32.totalorder 2, %s10
    // Predicated region
    $region37: #{tpu_custom_call.1} parent=5 // pred_check
      %p310 = pneg %p309
    $region38: #{tpu_custom_call.1} parent=5 // pred_check_branch
      %312 = sbr.rel (%p310) target = $region40
    $region39: #{tpu_custom_call.1} parent=5 // pred_region
      %s313 = ssub.s32 %s10, 2
      // Predicated region
      $region41: #{tpu_custom_call.1} parent=39 // pred_check
        %p314 = pneg %p109
      $region42: #{tpu_custom_call.1} parent=39 // pred_check_branch
        %316 = sbr.rel (%p314) target = $region44
      $region43: #{tpu_custom_call.1} parent=39 // pred_region
        %s317 = sadd.s32 %s21, %s22
        %p318 = scmp.lt.s32.totalorder %s317, 1
        %s319 = scalar_select %p318, %s317, 1
        %s320 = scalar_lea.vmem %s2, %s319
      $region44: #{tpu_custom_call.1} parent=39 // pred_fallthru
        _
      // Predicated region
      $region45: #{tpu_custom_call.1} parent=39 // pred_check
        %p321 = pneg %p137
      $region46: #{tpu_custom_call.1} parent=39 // pred_check_branch
        %323 = sbr.rel (%p321) target = $region48
      $region47: #{tpu_custom_call.1} parent=39 // pred_region
        %s324 = sadd.s32 %s21, %s22
        %p325 = scmp.lt.s32.totalorder %s324, 1
        %s326 = scalar_select %p325, %s324, 1
        %s327 = scalar_lea.vmem %s3, %s326
      $region48: #{tpu_custom_call.1} parent=39 // pred_fallthru
        _
    $region40: #{tpu_custom_call.1} parent=5 // pred_fallthru
      _
  $region6: #{tpu_custom_call.1} parent=0 // loop_footer
    %s14 = sadd.s32 1, %s10
  $region7: #{tpu_custom_call.1} parent=0 // loop_footer_branch
    %9 = sbr.rel target = $region3
  $region8: #{tpu_custom_call.1} parent=0 // loop_exit
    _

</llo_original>
